<compile_context>
chip_gen: v7x
topology: tpu7x:2x2x1
jax: 0.10.0
libtpu: 0.0.40
codegen_flags: <defaults>
</compile_context>

<pallas_src>
import functools

import jax
import jax.numpy as jnp
from jax import lax
from jax.experimental import pallas as pl
from jax.experimental.pallas import tpu as pltpu


def _round_up(x, m):
    return ((x + m - 1) // m) * m


def _gelu_exact(x):
    # PyTorch nn.GELU() default = exact erf formulation (kept in f32).
    return 0.5 * x * (1.0 + lax.erf(x / jnp.sqrt(2.0).astype(x.dtype)))


# ----------------------------------------------------------------------------- kernel
def _ffn_kernel(x_ref, w1_ref, b1_ref, w2_ref, b2_ref, o_ref, acc_ref):
    # x_ref:  (tm, dim)           resident across the k axis (index (i, 0))
    # w1_ref: (dim, tk)           b1_ref: (1, tk)      (biases always f32)
    # w2_ref: (tk, n_out)         b2_ref: (1, n_out)
    # o_ref:  (tm, n_out)         acc_ref: (tm, n_out) f32 scratch accumulator
    k = pl.program_id(1)

    @pl.when(k == 0)
    def _():
        acc_ref[...] = jnp.zeros_like(acc_ref)

    x = x_ref[...]
    # Matmul 1 on MXU: operands may be bf16 (default), accumulation is f32.
    h = jnp.dot(x.astype(w1_ref.dtype), w1_ref[...], preferred_element_type=jnp.float32)
    h = _gelu_exact(h + b1_ref[...])          # bias + exact-erf GELU in f32
    # Dropout(p=0.0) is the identity -> nothing to do.
    # Matmul 2 (reduction over inner_dim tiles) into the f32 accumulator.
    acc_ref[...] += jnp.dot(h.astype(w2_ref.dtype), w2_ref[...],
                            preferred_element_type=jnp.float32)

    @pl.when(k == pl.num_programs(1) - 1)
    def _():
        o_ref[...] = (acc_ref[...] + b2_ref[...]).astype(o_ref.dtype)


# -------------------------------------------------------------------- weight preparation
def prepare_ffn_weights(w1, b1, w2, b2, *, matmul_dtype=jnp.bfloat16, tk=512,
                        lane_pad_max_ratio=1.25):
    """One-time weight preparation (call at init, NOT inside the per-step forward).

    * Pads inner_dim up to a multiple of the reduction tile tk (zero cols of w1 / entries
      of b1 / rows of w2 contribute exactly 0 to the output).
    * Pads dim_out to a multiple of 128 only when the amplification is small (<= ~1.25x);
      no-op whenever dim_out % 128 == 0, skipped for narrow outputs like dim_out=32.
    * Casts matmul operands to `matmul_dtype` (bf16 default, MXU-native on v5e/v6e/v7x);
      pass matmul_dtype=None for strict f32 numerics. Biases always stay f32.
    """
    dim, inner_dim = w1.shape
    dim_out = w2.shape[1]

    # Lane-dense output only when cheap.
    n_out = _round_up(dim_out, 128)
    if n_out != dim_out and n_out > lane_pad_max_ratio * dim_out:
        n_out = dim_out

    # Reduction (inner_dim) tile: keep it a multiple of 128 (full MXU occupancy on v5e's
    # 128x128 array as well as v6e/v7x).
    tk_eff = min(tk, _round_up(inner_dim, 128))
    inner_p = _round_up(inner_dim, tk_eff)

    md = w1.dtype if matmul_dtype is None else jnp.dtype(matmul_dtype)
    w1p = jnp.pad(w1, ((0, 0), (0, inner_p - inner_dim))).astype(md)
    b1p = jnp.pad(b1, (0, inner_p - inner_dim)).reshape(1, inner_p).astype(jnp.float32)
    w2p = jnp.pad(w2, ((0, inner_p - inner_dim), (0, n_out - dim_out))).astype(md)
    b2p = jnp.pad(b2, (0, n_out - dim_out)).reshape(1, n_out).astype(jnp.float32)

    meta = dict(dim=dim, dim_out=dim_out, inner=inner_p, n_out=n_out, tk=tk_eff)
    return (w1p, b1p, w2p, b2p), meta


# ----------------------------------------------------------------------------- wrapper
def feed_forward_pallas(x, w1p, b1p, w2p, b2p, *, dim_out, tk, tm=256,
                        out_dtype=None, single_buffer_resident=True):
    """x: (batch, seq, dim) -> (batch, seq, dim_out).

    Weights must come from `prepare_ffn_weights` (pre-padded / pre-cast). x may be f32 or
    bf16; it is cast to the weight matmul dtype per-tile inside the kernel.

    tm notes: sweep 512-1024 on v5e/v6e (128 MiB VMEM, pair with the explicit
    vmem_limit_bytes below); keep tm <= 256 (or derive from the 64 MiB budget) on v7x.
    """
    batch, seq, dim = x.shape
    inner_p = w1p.shape[1]
    n_out = w2p.shape[1]
    assert inner_p % tk == 0
    M = batch * seq
    out_dtype = x.dtype if out_dtype is None else jnp.dtype(out_dtype)

    # --- Row tiling. Guarantee >= 2 row tiles when M > 8 so a 2-TC chip (v7x) can shard
    # the "parallel" row axis across both TensorCores.
    if M > 8:
        tm_eff = min(tm, _round_up(pl.cdiv(M, 2), 8))
    else:
        tm_eff = min(tm, 8)
    tm_eff = _round_up(max(tm_eff, 8), 8)
    m_padded = _round_up(M, tm_eff)
    grid_m = m_padded // tm_eff
    grid_k = inner_p // tk

    x2d = x.reshape(M, dim)
    if m_padded != M:
        # NOTE: padded rows compute gelu(b1)@w2 + b2 garbage; it is discarded by the [:M]
        # slice below and must never be aliased/accumulated downstream.
        x2d = jnp.pad(x2d, ((0, m_padded - M), (0, 0)))

    # --- BlockSpecs. Blocks whose index never changes over the whole grid are single-
    # buffered (a second buffer would be pure VMEM waste).
    resident_all = (grid_k == 1)

    def spec(shape, imap, constant):
        if single_buffer_resident and constant:
            return pl.BlockSpec(shape, imap, pipeline_mode=pl.Buffered(1))
        return pl.BlockSpec(shape, imap)

    in_specs = [
        pl.BlockSpec((tm_eff, dim), lambda i, k: (i, 0)),
        spec((dim, tk), lambda i, k: (0, k), constant=resident_all),
        spec((1, tk), lambda i, k: (0, k), constant=resident_all),
        spec((tk, n_out), lambda i, k: (k, 0), constant=resident_all),
        spec((1, n_out), lambda i, k: (0, 0), constant=True),
    ]
    out_spec = pl.BlockSpec((tm_eff, n_out), lambda i, k: (i, 0))

    # --- Explicit VMEM budget from the actual block footprint (+ headroom).
    x_it = jnp.dtype(x.dtype).itemsize
    md_it = jnp.dtype(w1p.dtype).itemsize
    o_it = jnp.dtype(out_dtype).itemsize
    wbuf = 1 if (single_buffer_resident and resident_all) else 2
    b2buf = 1 if single_buffer_resident else 2
    block_bytes = (
        2 * tm_eff * dim * x_it            # x tile (double-buffered)
        + wbuf * dim * tk * md_it          # w1 tile
        + wbuf * 8 * tk * 4                # b1 tile (sublane-padded)
        + wbuf * tk * n_out * md_it        # w2 tile
        + b2buf * 8 * n_out * 4            # b2 tile
        + 2 * tm_eff * n_out * o_it        # output tile
        + tm_eff * n_out * 4               # f32 accumulator scratch
    )
    vmem_limit = int(block_bytes * 1.5) + (4 << 20)
    vmem_limit = max(vmem_limit, 32 << 20)
    # TODO(synk): cap at ~60 MiB when targeting v7x (64 MiB VMEM per TensorCore).
    vmem_limit = min(vmem_limit, 100 << 20)

    cost = pl.CostEstimate(
        flops=2 * m_padded * (dim * inner_p + inner_p * n_out),
        transcendentals=m_padded * inner_p,                  # one erf per hidden activation
        bytes_accessed=(m_padded * dim * x_it + m_padded * n_out * o_it
                        + (w1p.size + w2p.size) * md_it
                        + (b1p.size + b2p.size) * 4),
    )

    out2d = pl.pallas_call(
        _ffn_kernel,
        out_shape=jax.ShapeDtypeStruct((m_padded, n_out), out_dtype),
        grid_spec=pltpu.PrefetchScalarGridSpec(
            num_scalar_prefetch=0,
            grid=(grid_m, grid_k),                 # reduction axis last
            in_specs=in_specs,
            out_specs=out_spec,
            scratch_shapes=[pltpu.VMEM((tm_eff, n_out), jnp.float32)],
        ),
        compiler_params=pltpu.CompilerParams(
            dimension_semantics=("parallel", "arbitrary"),
            vmem_limit_bytes=vmem_limit,
        ),
        cost_estimate=cost,
    )(x2d, w1p, b1p, w2p, b2p)

    if m_padded != M or n_out != dim_out:
        out2d = out2d[:M, :dim_out]
    return out2d.reshape(batch, seq, dim_out)


# ----------------------------------------------------------------------------- reference
def feed_forward_ref(x, w1, b1, w2, b2):
    h = _gelu_exact(jnp.einsum("bsd,di->bsi", x, w1) + b1)
    return jnp.einsum("bsi,io->bso", h, w2) + b2


if __name__ == "__main__":
    # Module config: dim=32, mult=4 -> inner_dim=128, dim_out=dim=32, glu=False, dropout=0.0
    batch, seq, dim, mult = 2, 8, 32, 4
    inner_dim = dim * mult
    dim_out = dim

    key = jax.random.PRNGKey(0)
    kx, k1, k2, k3, k4 = jax.random.split(key, 5)
    x = jax.random.normal(kx, (batch, seq, dim), dtype=jnp.float32)

    # Deterministic PyTorch-style init: U(-1/sqrt(fan_in), 1/sqrt(fan_in))
    lim1 = 1.0 / jnp.sqrt(dim)
    w1 = jax.random.uniform(k1, (dim, inner_dim), jnp.float32, -lim1, lim1)
    b1 = jax.random.uniform(k2, (inner_dim,), jnp.float32, -lim1, lim1)
    lim2 = 1.0 / jnp.sqrt(inner_dim)
    w2 = jax.random.uniform(k3, (inner_dim, dim_out), jnp.float32, -lim2, lim2)
    b2 = jax.random.uniform(k4, (dim_out,), jnp.float32, -lim2, lim2)

    ref = feed_forward_ref(x, w1, b1, w2, b2)

    def build(matmul_dtype, single_buffer):
        # Weight prep runs ONCE here (outside the jitted per-call path).
        weights, meta = prepare_ffn_weights(w1, b1, w2, b2, matmul_dtype=matmul_dtype)
        fn = jax.jit(functools.partial(
            feed_forward_pallas, dim_out=meta["dim_out"], tk=meta["tk"], tm=256,
            single_buffer_resident=single_buffer))
        return fn, weights

    def run(matmul_dtype):
        # pl.Buffered(1) single-buffering of resident blocks is a newer BlockSpec feature;
        # fall back to default double-buffering if this JAX/libtpu build rejects it.
        try:
            fn, weights = build(matmul_dtype, True)
            return jax.block_until_ready(fn(x, *weights))
        except Exception:
            fn, weights = build(matmul_dtype, False)
            return jax.block_until_ready(fn(x, *weights))

    # Default fast path: bf16 MXU operands (f32 accumulate / bias / GELU inside).
    out = run(jnp.bfloat16)
    assert out.shape == (batch, seq, dim_out)
    assert jnp.allclose(out, ref, atol=2e-2, rtol=2e-2), "bf16 fast path mismatch"

    # Strict-numerics path: f32 operands, matches PyTorch erf-GELU FFN at 1e-4.
    out32 = run(None)
    assert out32.shape == (batch, seq, dim_out)
    assert jnp.allclose(out32, ref, atol=1e-4, rtol=1e-4), "f32 strict path mismatch"

    print("KERNEL_OK")
</pallas_src>

<mosaic_0001>
module attributes {stable_mosaic.version = 11 : i64} {
  func.func @_ffn_kernel(%arg0: i32, %arg1: i32, %arg2: memref<8x32xf32, #tpu.memory_space<vmem>>, %arg3: memref<32x128xbf16, #tpu.memory_space<vmem>>, %arg4: memref<1x128xf32, #tpu.memory_space<vmem>>, %arg5: memref<128x32xbf16, #tpu.memory_space<vmem>>, %arg6: memref<1x32xf32, #tpu.memory_space<vmem>>, %arg7: memref<8x32xf32, #tpu.memory_space<vmem>>, %arg8: memref<8x32xf32, #tpu.memory_space<vmem>>) attributes {dimension_semantics = [#tpu.dimension_semantics<parallel>, #tpu.dimension_semantics<arbitrary>], iteration_bounds = array<i64: 2, 1>, scalar_prefetch = 0 : i64, scratch_operands = 1 : i64, tpu.core_type = #tpu.core_type<tc>, window_params = [{transform_indices = @transform_0, window_bounds = array<i64: 8, 32>}, {pipeline_mode = #tpu.pipeline_mode<synchronous>, transform_indices = @transform_1, window_bounds = array<i64: 32, 128>}, {pipeline_mode = #tpu.pipeline_mode<synchronous>, transform_indices = @transform_2, window_bounds = array<i64: 1, 128>}, {pipeline_mode = #tpu.pipeline_mode<synchronous>, transform_indices = @transform_3, window_bounds = array<i64: 128, 32>}, {pipeline_mode = #tpu.pipeline_mode<synchronous>, transform_indices = @transform_4, window_bounds = array<i64: 1, 32>}, {transform_indices = @transform_5, window_bounds = array<i64: 8, 32>}]} {
    %c0_i32 = arith.constant 0 : i32
    %0 = arith.cmpi eq, %arg1, %c0_i32 : i32
    %1 = arith.extui %0 : i1 to i32
    %c0_i32_0 = arith.constant 0 : i32
    %2 = arith.cmpi ne, %1, %c0_i32_0 : i32
    scf.if %2 {
      %cst_18 = arith.constant 0.000000e+00 : f32
      %28 = vector.broadcast %cst_18 : f32 to vector<8x32xf32>
      %c0_19 = arith.constant 0 : index
      %c0_20 = arith.constant 0 : index
      %29 = vector.load %arg8[%c0_19, %c0_20] : memref<8x32xf32, #tpu.memory_space<vmem>>, vector<8x32xf32>
      tpu.vector_store %arg8[%c0_19, %c0_20], %28 {strides = array<i32>} : memref<8x32xf32, #tpu.memory_space<vmem>>, vector<8x32xf32>,
    } else {
    }
    %c0 = arith.constant 0 : index
    %c0_1 = arith.constant 0 : index
    %3 = vector.load %arg2[%c0, %c0_1] : memref<8x32xf32, #tpu.memory_space<vmem>>, vector<8x32xf32>
    %4 = arith.truncf %3 : vector<8x32xf32> to vector<8x32xbf16>
    %c0_2 = arith.constant 0 : index
    %c0_3 = arith.constant 0 : index
    %5 = vector.load %arg3[%c0_2, %c0_3] : memref<32x128xbf16, #tpu.memory_space<vmem>>, vector<32x128xbf16>
    %cst = arith.constant dense<0.000000e+00> : vector<8x128xf32>
    %6 = tpu.matmul %4, %5, %cst {dimension_numbers = #tpu.dot_dimension_numbers<[1], [0], [0], [1], [0, 0, 1, 1], [], []>} : vector<8x32xbf16>, vector<32x128xbf16>, vector<8x128xf32> -> vector<8x128xf32>
    %c0_4 = arith.constant 0 : index
    %c0_5 = arith.constant 0 : index
    %7 = vector.load %arg4[%c0_4, %c0_5] : memref<1x128xf32, #tpu.memory_space<vmem>>, vector<1x128xf32>
    %8 = vector.broadcast %7 : vector<1x128xf32> to vector<8x128xf32>
    %9 = arith.addf %6, %8 : vector<8x128xf32>
    %cst_6 = arith.constant 5.000000e-01 : f32
    %10 = vector.broadcast %cst_6 : f32 to vector<8x128xf32>
    %11 = arith.mulf %10, %9 : vector<8x128xf32>
    %cst_7 = arith.constant 2.000000e+00 : f32
    %12 = math.sqrt %cst_7 : f32
    %13 = vector.broadcast %12 : f32 to vector<8x128xf32>
    %14 = arith.divf %9, %13 : vector<8x128xf32>
    %15 = math.erf %14 : vector<8x128xf32>
    %cst_8 = arith.constant 1.000000e+00 : f32
    %16 = vector.broadcast %cst_8 : f32 to vector<8x128xf32>
    %17 = arith.addf %16, %15 : vector<8x128xf32>
    %18 = arith.mulf %11, %17 : vector<8x128xf32>
    %c0_9 = arith.constant 0 : index
    %c0_10 = arith.constant 0 : index
    %19 = vector.load %arg8[%c0_9, %c0_10] : memref<8x32xf32, #tpu.memory_space<vmem>>, vector<8x32xf32>
    %20 = arith.truncf %18 : vector<8x128xf32> to vector<8x128xbf16>
    %c0_11 = arith.constant 0 : index
    %c0_12 = arith.constant 0 : index
    %21 = vector.load %arg5[%c0_11, %c0_12] : memref<128x32xbf16, #tpu.memory_space<vmem>>, vector<128x32xbf16>
    %cst_13 = arith.constant dense<0.000000e+00> : vector<8x32xf32>
    %22 = tpu.matmul %20, %21, %cst_13 {dimension_numbers = #tpu.dot_dimension_numbers<[1], [0], [0], [1], [0, 0, 1, 1], [], []>} : vector<8x128xbf16>, vector<128x32xbf16>, vector<8x32xf32> -> vector<8x32xf32>
    %23 = arith.addf %19, %22 : vector<8x32xf32>
    %c0_14 = arith.constant 0 : index
    %c0_15 = arith.constant 0 : index
    %24 = vector.load %arg8[%c0_14, %c0_15] : memref<8x32xf32, #tpu.memory_space<vmem>>, vector<8x32xf32>
    tpu.vector_store %arg8[%c0_14, %c0_15], %23 {strides = array<i32>} : memref<8x32xf32, #tpu.memory_space<vmem>>, vector<8x32xf32>,
    %c0_i32_16 = arith.constant 0 : i32
    %25 = arith.cmpi eq, %arg1, %c0_i32_16 : i32
    %26 = arith.extui %25 : i1 to i32
    %c0_i32_17 = arith.constant 0 : i32
    %27 = arith.cmpi ne, %26, %c0_i32_17 : i32
    scf.if %27 {
      %c0_18 = arith.constant 0 : index
      %c0_19 = arith.constant 0 : index
      %28 = vector.load %arg8[%c0_18, %c0_19] : memref<8x32xf32, #tpu.memory_space<vmem>>, vector<8x32xf32>
      %c0_20 = arith.constant 0 : index
      %c0_21 = arith.constant 0 : index
      %29 = vector.load %arg6[%c0_20, %c0_21] : memref<1x32xf32, #tpu.memory_space<vmem>>, vector<1x32xf32>
      %30 = vector.broadcast %29 : vector<1x32xf32> to vector<8x32xf32>
      %31 = arith.addf %28, %30 : vector<8x32xf32>
      %c0_22 = arith.constant 0 : index
      %c0_23 = arith.constant 0 : index
      %32 = vector.load %arg7[%c0_22, %c0_23] : memref<8x32xf32, #tpu.memory_space<vmem>>, vector<8x32xf32>
      tpu.vector_store %arg7[%c0_22, %c0_23], %31 {strides = array<i32>} : memref<8x32xf32, #tpu.memory_space<vmem>>, vector<8x32xf32>,
    } else {
    }
    return
  }
  func.func @transform_0(%arg0: i32, %arg1: i32) -> (i32, i32) {
    %c0_i32 = arith.constant 0 : i32
    %c0_i32_0 = arith.constant 0 : i32
    return %arg0, %c0_i32 : i32, i32
  }
  func.func @transform_1(%arg0: i32, %arg1: i32) -> (i32, i32) {
    %c0_i32 = arith.constant 0 : i32
    %c0_i32_0 = arith.constant 0 : i32
    return %c0_i32, %arg1 : i32, i32
  }
  func.func @transform_2(%arg0: i32, %arg1: i32) -> (i32, i32) {
    %c0_i32 = arith.constant 0 : i32
    %c0_i32_0 = arith.constant 0 : i32
    return %c0_i32, %arg1 : i32, i32
  }
  func.func @transform_3(%arg0: i32, %arg1: i32) -> (i32, i32) {
    %c0_i32 = arith.constant 0 : i32
    %c0_i32_0 = arith.constant 0 : i32
    return %arg1, %c0_i32 : i32, i32
  }
  func.func @transform_4(%arg0: i32, %arg1: i32) -> (i32, i32) {
    %c0_i32 = arith.constant 0 : i32
    %c0_i32_0 = arith.constant 0 : i32
    %c0_i32_1 = arith.constant 0 : i32
    return %c0_i32, %c0_i32_0 : i32, i32
  }
  func.func @transform_5(%arg0: i32, %arg1: i32) -> (i32, i32) {
    %c0_i32 = arith.constant 0 : i32
    %c0_i32_0 = arith.constant 0 : i32
    return %arg0, %c0_i32 : i32, i32
  }
}

module attributes {stable_mosaic.version = 11 : i64} {
  func.func @_ffn_kernel(%arg0: i32, %arg1: i32, %arg2: memref<8x32xf32, #tpu.memory_space<vmem>>, %arg3: memref<32x128xbf16, #tpu.memory_space<vmem>>, %arg4: memref<1x128xf32, #tpu.memory_space<vmem>>, %arg5: memref<128x32xbf16, #tpu.memory_space<vmem>>, %arg6: memref<1x32xf32, #tpu.memory_space<vmem>>, %arg7: memref<8x32xf32, #tpu.memory_space<vmem>>, %arg8: memref<8x32xf32, #tpu.memory_space<vmem>>) attributes {dimension_semantics = [#tpu.dimension_semantics<parallel>, #tpu.dimension_semantics<arbitrary>], iteration_bounds = array<i64: 2, 1>, scalar_prefetch = 0 : i64, scratch_operands = 1 : i64, tpu.core_type = #tpu.core_type<tc>, window_params = [{transform_indices = @transform_0, window_bounds = array<i64: 8, 32>}, {transform_indices = @transform_1, window_bounds = array<i64: 32, 128>}, {transform_indices = @transform_2, window_bounds = array<i64: 1, 128>}, {transform_indices = @transform_3, window_bounds = array<i64: 128, 32>}, {pipeline_mode = #tpu.pipeline_mode<synchronous>, transform_indices = @transform_4, window_bounds = array<i64: 1, 32>}, {transform_indices = @transform_5, window_bounds = array<i64: 8, 32>}]} {
    %c0_i32 = arith.constant 0 : i32
    %0 = arith.cmpi eq, %arg1, %c0_i32 : i32
    %1 = arith.extui %0 : i1 to i32
    %c0_i32_0 = arith.constant 0 : i32
    %2 = arith.cmpi ne, %1, %c0_i32_0 : i32
    scf.if %2 {
      %cst_18 = arith.constant 0.000000e+00 : f32
      %28 = vector.broadcast %cst_18 : f32 to vector<8x32xf32>
      %c0_19 = arith.constant 0 : index
      %c0_20 = arith.constant 0 : index
      %29 = vector.load %arg8[%c0_19, %c0_20] : memref<8x32xf32, #tpu.memory_space<vmem>>, vector<8x32xf32>
      tpu.vector_store %arg8[%c0_19, %c0_20], %28 {strides = array<i32>} : memref<8x32xf32, #tpu.memory_space<vmem>>, vector<8x32xf32>,
    } else {
    }
    %c0 = arith.constant 0 : index
    %c0_1 = arith.constant 0 : index
    %3 = vector.load %arg2[%c0, %c0_1] : memref<8x32xf32, #tpu.memory_space<vmem>>, vector<8x32xf32>
    %4 = arith.truncf %3 : vector<8x32xf32> to vector<8x32xbf16>
    %c0_2 = arith.constant 0 : index
    %c0_3 = arith.constant 0 : index
    %5 = vector.load %arg3[%c0_2, %c0_3] : memref<32x128xbf16, #tpu.memory_space<vmem>>, vector<32x128xbf16>
    %cst = arith.constant dense<0.000000e+00> : vector<8x128xf32>
    %6 = tpu.matmul %4, %5, %cst {dimension_numbers = #tpu.dot_dimension_numbers<[1], [0], [0], [1], [0, 0, 1, 1], [], []>} : vector<8x32xbf16>, vector<32x128xbf16>, vector<8x128xf32> -> vector<8x128xf32>
    %c0_4 = arith.constant 0 : index
    %c0_5 = arith.constant 0 : index
    %7 = vector.load %arg4[%c0_4, %c0_5] : memref<1x128xf32, #tpu.memory_space<vmem>>, vector<1x128xf32>
    %8 = vector.broadcast %7 : vector<1x128xf32> to vector<8x128xf32>
    %9 = arith.addf %6, %8 : vector<8x128xf32>
    %cst_6 = arith.constant 5.000000e-01 : f32
    %10 = vector.broadcast %cst_6 : f32 to vector<8x128xf32>
    %11 = arith.mulf %10, %9 : vector<8x128xf32>
    %cst_7 = arith.constant 2.000000e+00 : f32
    %12 = math.sqrt %cst_7 : f32
    %13 = vector.broadcast %12 : f32 to vector<8x128xf32>
    %14 = arith.divf %9, %13 : vector<8x128xf32>
    %15 = math.erf %14 : vector<8x128xf32>
    %cst_8 = arith.constant 1.000000e+00 : f32
    %16 = vector.broadcast %cst_8 : f32 to vector<8x128xf32>
    %17 = arith.addf %16, %15 : vector<8x128xf32>
    %18 = arith.mulf %11, %17 : vector<8x128xf32>
    %c0_9 = arith.constant 0 : index
    %c0_10 = arith.constant 0 : index
    %19 = vector.load %arg8[%c0_9, %c0_10] : memref<8x32xf32, #tpu.memory_space<vmem>>, vector<8x32xf32>
    %20 = arith.truncf %18 : vector<8x128xf32> to vector<8x128xbf16>
    %c0_11 = arith.constant 0 : index
    %c0_12 = arith.constant 0 : index
    %21 = vector.load %arg5[%c0_11, %c0_12] : memref<128x32xbf16, #tpu.memory_space<vmem>>, vector<128x32xbf16>
    %cst_13 = arith.constant dense<0.000000e+00> : vector<8x32xf32>
    %22 = tpu.matmul %20, %21, %cst_13 {dimension_numbers = #tpu.dot_dimension_numbers<[1], [0], [0], [1], [0, 0, 1, 1], [], []>} : vector<8x128xbf16>, vector<128x32xbf16>, vector<8x32xf32> -> vector<8x32xf32>
    %23 = arith.addf %19, %22 : vector<8x32xf32>
    %c0_14 = arith.constant 0 : index
    %c0_15 = arith.constant 0 : index
    %24 = vector.load %arg8[%c0_14, %c0_15] : memref<8x32xf32, #tpu.memory_space<vmem>>, vector<8x32xf32>
    tpu.vector_store %arg8[%c0_14, %c0_15], %23 {strides = array<i32>} : memref<8x32xf32, #tpu.memory_space<vmem>>, vector<8x32xf32>,
    %c0_i32_16 = arith.constant 0 : i32
    %25 = arith.cmpi eq, %arg1, %c0_i32_16 : i32
    %26 = arith.extui %25 : i1 to i32
    %c0_i32_17 = arith.constant 0 : i32
    %27 = arith.cmpi ne, %26, %c0_i32_17 : i32
    scf.if %27 {
      %c0_18 = arith.constant 0 : index
      %c0_19 = arith.constant 0 : index
      %28 = vector.load %arg8[%c0_18, %c0_19] : memref<8x32xf32, #tpu.memory_space<vmem>>, vector<8x32xf32>
      %c0_20 = arith.constant 0 : index
      %c0_21 = arith.constant 0 : index
      %29 = vector.load %arg6[%c0_20, %c0_21] : memref<1x32xf32, #tpu.memory_space<vmem>>, vector<1x32xf32>
      %30 = vector.broadcast %29 : vector<1x32xf32> to vector<8x32xf32>
      %31 = arith.addf %28, %30 : vector<8x32xf32>
      %c0_22 = arith.constant 0 : index
      %c0_23 = arith.constant 0 : index
      %32 = vector.load %arg7[%c0_22, %c0_23] : memref<8x32xf32, #tpu.memory_space<vmem>>, vector<8x32xf32>
      tpu.vector_store %arg7[%c0_22, %c0_23], %31 {strides = array<i32>} : memref<8x32xf32, #tpu.memory_space<vmem>>, vector<8x32xf32>,
    } else {
    }
    return
  }
  func.func @transform_0(%arg0: i32, %arg1: i32) -> (i32, i32) {
    %c0_i32 = arith.constant 0 : i32
    %c0_i32_0 = arith.constant 0 : i32
    return %arg0, %c0_i32 : i32, i32
  }
  func.func @transform_1(%arg0: i32, %arg1: i32) -> (i32, i32) {
    %c0_i32 = arith.constant 0 : i32
    %c0_i32_0 = arith.constant 0 : i32
    return %c0_i32, %arg1 : i32, i32
  }
  func.func @transform_2(%arg0: i32, %arg1: i32) -> (i32, i32) {
    %c0_i32 = arith.constant 0 : i32
    %c0_i32_0 = arith.constant 0 : i32
    return %c0_i32, %arg1 : i32, i32
  }
  func.func @transform_3(%arg0: i32, %arg1: i32) -> (i32, i32) {
    %c0_i32 = arith.constant 0 : i32
    %c0_i32_0 = arith.constant 0 : i32
    return %arg1, %c0_i32 : i32, i32
  }
  func.func @transform_4(%arg0: i32, %arg1: i32) -> (i32, i32) {
    %c0_i32 = arith.constant 0 : i32
    %c0_i32_0 = arith.constant 0 : i32
    %c0_i32_1 = arith.constant 0 : i32
    return %c0_i32, %c0_i32_0 : i32, i32
  }
  func.func @transform_5(%arg0: i32, %arg1: i32) -> (i32, i32) {
    %c0_i32 = arith.constant 0 : i32
    %c0_i32_0 = arith.constant 0 : i32
    return %arg0, %c0_i32 : i32, i32
  }
}

</mosaic_0001>

<llo_original>
// kernel: feed_forward_pallas.1
$region0: #{feed_forward_pallas.1}
  #allocation0 [shape = 'u32[]', space=smem, size = 0x4, offset = 0x4, fixed_abs, tag = 'smem constant byte address 0x4 - core index']
  #allocation1 [shape = 'u32[144,128]{1,0:T(1,128)}', space=vmem, size = 0x12000, scoped, tag = 'internal scratch']
  #allocation2 [shape = 'f32[8,32]{1,0:T(8,128)}', space=vmem, size = 0x1000, scoped, tag = 'scratch operand']
  %s0 = inlined_call_operand.vmem [shape: f32[16,32], index: 0, kind: input, shape index: {}]
  %s1 = inlined_call_operand.vmem [shape: bf16[32,128], index: 1, kind: input, shape index: {}]
  %s2 = inlined_call_operand.vmem [shape: f32[1,128], index: 2, kind: input, shape index: {}]
  %s3 = inlined_call_operand.vmem [shape: bf16[128,32], index: 3, kind: input, shape index: {}]
  %s4 = inlined_call_operand.vmem [shape: f32[1,32], index: 4, kind: input, shape index: {}]
  %s5 = inlined_call_operand.hbm [shape: f32[16,32], index: 5, kind: output, shape index: {}]
  %s6 = sld [smem:[#allocation0]]
  $region61: #{feed_forward_pallas.1} parent=0
    _
  %s8 = ssub.s32 1, %s6
  %s9 = scalar_select 0, %s8, %s6
  $region1: #{feed_forward_pallas.1} parent=0
    #allocation3 [shape = 'u8[8192]{0}', space=vmem, size = 0x2000, scoped, tag = 'output window, operand 0']
    #allocation4 [shape = 's32[2]{0}', space=sflag, size = 0x8, scoped, tag = 'scoped memory for feed_forward_pallas.1']
    %10 = vsyncpa [#allocation4], 0
    %s11 = scalar_lea.sflag [#allocation4], 1
    %12 = vsyncpa %s11, 0
    loop: start=0, step=1, limit=4
    $region2: #{feed_forward_pallas.1} parent=1 // loop_pre_header
      _
    $region3: #{feed_forward_pallas.1} parent=1 // loop_header
      %s14 = sphi 0, %s18
      %p15 = scmp.ge.s32.totalorder %s14, 4
      %s21 = sphi 0, %s33
      %s22 = sphi 0, %s29
      %s23 = sphi 0, %s21
      %s24 = sphi 0, %s22
      %s25 = sphi 0, %s23
      %s26 = sphi 0, %s24
      %s36 = sphi 0, %s38
      %s39 = sphi 0, %s36
      %s40 = sphi 0, %s39
      %s56 = sphi 0, %s40
      %s62 = sphi 0, %s64
      %s65 = sphi 0, %s62
      %s66 = sphi 0, %s65
      %s82 = sphi 0, %s66
      %s88 = sphi 0, %s90
      %s91 = sphi 0, %s88
      %s92 = sphi 0, %s91
      %s108 = sphi 0, %s92
      %s114 = sphi 0, %s116
      %s117 = sphi 0, %s114
      %s118 = sphi 0, %s117
      %s134 = sphi 0, %s118
      %s138 = sphi 0, %s138
      %s140 = sphi 0, %s138
      %s141 = sphi 0, %s140
      %s155 = sphi 0, %s141
      %s161 = sphi 0, %s163
      %s164 = sphi 0, %s161
      %s165 = sphi 0, %s164
      %s181 = sphi 0, %s165
    $region4: #{feed_forward_pallas.1} parent=1 // loop_header_branch
      %17 = sbr.rel (%p15) target = $region8
    $region5: #{feed_forward_pallas.1} parent=1 // loop_body
      %s19 = ssub.s32 %s14, 1
      %s20 = ssub.s32 %s14, 2
      %s27 = sadd.s32 1, %s22
      %p28 = scmp.ge.s32.totalorder %s27, 1
      %s29 = scalar_select %p28, 0, %s27
      %s30 = sadd.s32 1, %s21
      %s31 = scalar_select %p28, %s30, %s21
      %p32 = scmp.ge.s32.totalorder %s31, 2
      %s33 = scalar_select %p32, 0, %s31
      %s34 = ssub.s32 %s21, %s33
      %p35 = scmp.eq.s32.totalorder %s34, 0
      %s37 = sadd.s32 %s36, 1
      %s38 = scalar_select %p35, %s36, %s37
      %p41 = pneg %p35
      %p42 = scmp.eq.s32.totalorder %s14, 1
      %p43 = por %p41, %p42
      %p44 = scmp.ne.s32.totalorder %s36, %s39
      %p45 = scmp.eq.s32.totalorder %s14, 0
      %p46 = por %p44, %p45
      %p47 = scmp.ne.s32.totalorder %s36, %s39
      %p48 = scmp.eq.s32.totalorder %s19, 1
      %p49 = por %p47, %p48
      %p50 = scmp.ne.s32.totalorder %s39, %s40
      %p51 = scmp.eq.s32.totalorder %s19, 0
      %p52 = por %p50, %p51
      %p53 = scmp.ne.s32.totalorder %s39, %s40
      %p54 = scmp.eq.s32.totalorder %s20, 1
      %p55 = por %p53, %p54
      %p57 = scmp.ne.s32.totalorder %s40, %s56
      %p58 = scmp.eq.s32.totalorder %s20, 0
      %p59 = por %p57, %p58
      %s60 = ssub.s32 %s22, %s29
      %p61 = scmp.eq.s32.totalorder %s60, 0
      %s63 = sadd.s32 %s62, 1
      %s64 = scalar_select %p61, %s62, %s63
      %p67 = pneg %p61
      %p68 = scmp.eq.s32.totalorder %s14, 1
      %p69 = por %p67, %p68
      %p70 = scmp.ne.s32.totalorder %s62, %s65
      %p71 = scmp.eq.s32.totalorder %s14, 0
      %p72 = por %p70, %p71
      %p73 = scmp.ne.s32.totalorder %s62, %s65
      %p74 = scmp.eq.s32.totalorder %s19, 1
      %p75 = por %p73, %p74
      %p76 = scmp.ne.s32.totalorder %s65, %s66
      %p77 = scmp.eq.s32.totalorder %s19, 0
      %p78 = por %p76, %p77
      %p79 = scmp.ne.s32.totalorder %s65, %s66
      %p80 = scmp.eq.s32.totalorder %s20, 1
      %p81 = por %p79, %p80
      %p83 = scmp.ne.s32.totalorder %s66, %s82
      %p84 = scmp.eq.s32.totalorder %s20, 0
      %p85 = por %p83, %p84
      %s86 = ssub.s32 %s22, %s29
      %p87 = scmp.eq.s32.totalorder %s86, 0
      %s89 = sadd.s32 %s88, 1
      %s90 = scalar_select %p87, %s88, %s89
      %p93 = pneg %p87
      %p94 = scmp.eq.s32.totalorder %s14, 1
      %p95 = por %p93, %p94
      %p96 = scmp.ne.s32.totalorder %s88, %s91
      %p97 = scmp.eq.s32.totalorder %s14, 0
      %p98 = por %p96, %p97
      %p99 = scmp.ne.s32.totalorder %s88, %s91
      %p100 = scmp.eq.s32.totalorder %s19, 1
      %p101 = por %p99, %p100
      %p102 = scmp.ne.s32.totalorder %s91, %s92
      %p103 = scmp.eq.s32.totalorder %s19, 0
      %p104 = por %p102, %p103
      %p105 = scmp.ne.s32.totalorder %s91, %s92
      %p106 = scmp.eq.s32.totalorder %s20, 1
      %p107 = por %p105, %p106
      %p109 = scmp.ne.s32.totalorder %s92, %s108
      %p110 = scmp.eq.s32.totalorder %s20, 0
      %p111 = por %p109, %p110
      %s112 = ssub.s32 %s22, %s29
      %p113 = scmp.eq.s32.totalorder %s112, 0
      %s115 = sadd.s32 %s114, 1
      %s116 = scalar_select %p113, %s114, %s115
      %p119 = pneg %p113
      %p120 = scmp.eq.s32.totalorder %s14, 1
      %p121 = por %p119, %p120
      %p122 = scmp.ne.s32.totalorder %s114, %s117
      %p123 = scmp.eq.s32.totalorder %s14, 0
      %p124 = por %p122, %p123
      %p125 = scmp.ne.s32.totalorder %s114, %s117
      %p126 = scmp.eq.s32.totalorder %s19, 1
      %p127 = por %p125, %p126
      %p128 = scmp.ne.s32.totalorder %s117, %s118
      %p129 = scmp.eq.s32.totalorder %s19, 0
      %p130 = por %p128, %p129
      %p131 = scmp.ne.s32.totalorder %s117, %s118
      %p132 = scmp.eq.s32.totalorder %s20, 1
      %p133 = por %p131, %p132
      %p135 = scmp.ne.s32.totalorder %s118, %s134
      %p136 = scmp.eq.s32.totalorder %s20, 0
      %p137 = por %p135, %p136
      %s139 = sadd.s32 %s138, 1
      %p142 = scmp.eq.s32.totalorder %s14, 1
      %p143 = scmp.ne.s32.totalorder %s138, %s140
      %p144 = scmp.eq.s32.totalorder %s14, 0
      %p145 = por %p143, %p144
      %p146 = scmp.ne.s32.totalorder %s138, %s140
      %p147 = scmp.eq.s32.totalorder %s19, 1
      %p148 = por %p146, %p147
      %p149 = scmp.ne.s32.totalorder %s140, %s141
      %p150 = scmp.eq.s32.totalorder %s19, 0
      %p151 = por %p149, %p150
      %p152 = scmp.ne.s32.totalorder %s140, %s141
      %p153 = scmp.eq.s32.totalorder %s20, 1
      %p154 = por %p152, %p153
      %p156 = scmp.ne.s32.totalorder %s141, %s155
      %p157 = scmp.eq.s32.totalorder %s20, 0
      %p158 = por %p156, %p157
      %s159 = ssub.s32 %s21, %s33
      %p160 = scmp.eq.s32.totalorder %s159, 0
      %s162 = sadd.s32 %s161, 1
      %s163 = scalar_select %p160, %s161, %s162
      %p166 = pneg %p160
      %p167 = scmp.eq.s32.totalorder %s14, 1
      %p168 = por %p166, %p167
      %p169 = scmp.ne.s32.totalorder %s161, %s164
      %p170 = scmp.eq.s32.totalorder %s14, 0
      %p171 = por %p169, %p170
      %p172 = scmp.ne.s32.totalorder %s161, %s164
      %p173 = scmp.eq.s32.totalorder %s19, 1
      %p174 = por %p172, %p173
      %p175 = scmp.ne.s32.totalorder %s164, %s165
      %p176 = scmp.eq.s32.totalorder %s19, 0
      %p177 = por %p175, %p176
      %p178 = scmp.ne.s32.totalorder %s164, %s165
      %p179 = scmp.eq.s32.totalorder %s20, 1
      %p180 = por %p178, %p179
      %p182 = scmp.ne.s32.totalorder %s165, %s181
      %p183 = scmp.eq.s32.totalorder %s20, 0
      %p184 = por %p182, %p183
      %p185 = scmp.le.s32.totalorder 1, %s14
      %p186 = scmp.lt.s32.totalorder %s14, 3
      %p187 = pnand %p185, %p186
      %p188 = pneg %p187
      // Predicated region
      $region9: #{feed_forward_pallas.1} parent=5 // pred_check
        _
      $region10: #{feed_forward_pallas.1} parent=5 // pred_check_branch
        %190 = sbr.rel (%p187) target = $region12
      $region11: #{feed_forward_pallas.1} parent=5 // pred_region
        %s191 = ssub.s32 %s14, 1
        // Predicated region
        $region13: #{feed_forward_pallas.1} parent=11 // pred_check
          %p192 = pneg %p78
        $region14: #{feed_forward_pallas.1} parent=11 // pred_check_branch
          %194 = sbr.rel (%p192) target = $region16
        $region15: #{feed_forward_pallas.1} parent=11 // pred_region
          %p195 = scmp.lt.s32.totalorder %s24, 0
          %s196 = scalar_select %p195, %s24, 0
          %s197 = smul.addr %s196, 4
          %s198 = scalar_lea.vmem %s1, %s197
        $region16: #{feed_forward_pallas.1} parent=11 // pred_fallthru
          _
        // Predicated region
        $region17: #{feed_forward_pallas.1} parent=11 // pred_check
          %p199 = pneg %p104
        $region18: #{feed_forward_pallas.1} parent=11 // pred_check_branch
          %201 = sbr.rel (%p199) target = $region20
        $region19: #{feed_forward_pallas.1} parent=11 // pred_region
          %p202 = scmp.lt.s32.totalorder %s24, 0
          %s203 = scalar_select %p202, %s24, 0
          %s204 = scalar_lea.vmem %s2, %s203
        $region20: #{feed_forward_pallas.1} parent=11 // pred_fallthru
          _
        // Predicated region
        $region21: #{feed_forward_pallas.1} parent=11 // pred_check
          %p205 = pneg %p130
        $region22: #{feed_forward_pallas.1} parent=11 // pred_check_branch
          %207 = sbr.rel (%p205) target = $region24
        $region23: #{feed_forward_pallas.1} parent=11 // pred_region
          %s208 = smul.u32 16, %s24
          %p209 = scmp.lt.s32.totalorder %s208, 15
          %s210 = scalar_select %p209, %s208, 15
          %s211 = smul.addr %s210, 4
          %s212 = scalar_lea.vmem %s3, %s211
          %s213 = smul.u32 16, %s24
        $region24: #{feed_forward_pallas.1} parent=11 // pred_fallthru
          _
        // Predicated region
        $region25: #{feed_forward_pallas.1} parent=11 // pred_check
          %p214 = pneg %p151
        $region26: #{feed_forward_pallas.1} parent=11 // pred_check_branch
          %216 = sbr.rel (%p214) target = $region28
        $region27: #{feed_forward_pallas.1} parent=11 // pred_region
          _
        $region28: #{feed_forward_pallas.1} parent=11 // pred_fallthru
          _
      $region12: #{feed_forward_pallas.1} parent=5 // pred_fallthru
        _
      %p217 = scmp.lt.s32.totalorder %s14, 2
      // Predicated region
      $region29: #{feed_forward_pallas.1} parent=5 // pred_check
        %p218 = pneg %p217
      $region30: #{feed_forward_pallas.1} parent=5 // pred_check_branch
        %220 = sbr.rel (%p218) target = $region32
      $region31: #{feed_forward_pallas.1} parent=5 // pred_region
        // Predicated region
        $region33: #{feed_forward_pallas.1} parent=31 // pred_check
          %p221 = pneg %p46
        $region34: #{feed_forward_pallas.1} parent=31 // pred_check_branch
          %223 = sbr.rel (%p221) target = $region36
        $region35: #{feed_forward_pallas.1} parent=31 // pred_region
          %p224 = scmp.lt.s32.totalorder %s21, 1
          %s225 = scalar_select %p224, %s21, 1
          %s226 = smul.addr %s225, 8
          %s227 = scalar_lea.vmem %s0, %s226
        $region36: #{feed_forward_pallas.1} parent=31 // pred_fallthru
          _
      $region32: #{feed_forward_pallas.1} parent=5 // pred_fallthru
        _
      %p228 = scmp.le.s32.totalorder 1, %s14
      %p229 = scmp.lt.s32.totalorder %s14, 3
      %p230 = pnand %p228, %p229
      %p231 = pneg %p230
      // Predicated region
      $region37: #{feed_forward_pallas.1} parent=5 // pred_check
        _
      $region38: #{feed_forward_pallas.1} parent=5 // pred_check_branch
        %233 = sbr.rel (%p230) target = $region40
      $region39: #{feed_forward_pallas.1} parent=5 // pred_region
        %s234 = ssub.s32 %s14, 1
        %p235 = scmp.lt.s32.totalorder %s23, 1
        %s236 = scalar_select %p235, %s23, 1
        %s237 = smul.addr %s236, 8
        %s238 = scalar_lea.vmem %s0, %s237
        %p239 = pneg %p52
        %p240 = pneg %p49
        %p241 = scmp.lt.s32.totalorder %s24, 0
        %s242 = scalar_select %p241, %s24, 0
        %s243 = smul.addr %s242, 4
        %s244 = scalar_lea.vmem %s1, %s243
        %p245 = pneg %p78
        %p246 = pneg %p75
        %p247 = scmp.lt.s32.totalorder %s24, 0
        %s248 = scalar_select %p247, %s24, 0
        %s249 = scalar_lea.vmem %s2, %s248
        %p250 = pneg %p104
        %p251 = pneg %p101
        %s252 = smul.u32 16, %s24
        %p253 = scmp.lt.s32.totalorder %s252, 15
        %s254 = scalar_select %p253, %s252, 15
        %s255 = smul.addr %s254, 4
        %s256 = scalar_lea.vmem %s3, %s255
        %p257 = pneg %p130
        %p258 = pneg %p127
        %p259 = pneg %p151
        %p260 = pneg %p148
        %p261 = pneg %p177
        %p262 = pneg %p174
        %s263 = sand.u32 %s164, 1
        %s264 = scalar_lea.sflag [#allocation4], %s263
        %s265 = sand.u32 %s164, 1
        %s266 = smul.addr %s265, 8
        %s267 = scalar_lea.vmem [#allocation3], %s266
        %p268 = scmp.lt.s32.totalorder %s23, 1
        %s269 = scalar_select %p268, %s23, 1
        %s270 = smul.addr %s269, 8
        %s271 = scalar_lea.vmem %s0, %s270
        %p272 = scmp.lt.s32.totalorder %s24, 0
        %s273 = scalar_select %p272, %s24, 0
        %s274 = smul.addr %s273, 4
        %s275 = scalar_lea.vmem %s1, %s274
        %p276 = scmp.lt.s32.totalorder %s24, 0
        %s277 = scalar_select %p276, %s24, 0
        %s278 = scalar_lea.vmem %s2, %s277
        %s279 = smul.u32 16, %s24
        %p280 = scmp.lt.s32.totalorder %s279, 15
        %s281 = scalar_select %p280, %s279, 15
        %s282 = smul.addr %s281, 4
        %s283 = scalar_lea.vmem %s3, %s282
        %s284 = smul.u32 16, %s24
        %p286 = scmp.eq.s32.totalorder %s24, 0
        // Predicated region
        $region41: #{feed_forward_pallas.1} parent=39 // pred_check
          %p287 = pneg %p286
        $region42: #{feed_forward_pallas.1} parent=39 // pred_check_branch
          %289 = sbr.rel (%p287) target = $region44
        $region43: #{feed_forward_pallas.1} parent=39 // pred_region
          %vm290 = vcmask 261120
          %291 = vst.msk [vmem:[#allocation2] sm:$0xff] %vm290, 0.0
        $region44: #{feed_forward_pallas.1} parent=39 // pred_fallthru
          _
        %v292 = vld [vmem:[%s271] sm:$0xff]
        %v293 = vpack.c.bf16 %v292, %v292
        %v294 = vld [vmem:[%s275] sm:$0xf]
        %v295 = vld [vmem:[%s275 + $0x4] sm:$0xf]
        %v296 = vld [vmem:[%s275 + $0x8] sm:$0xf]
        %v297 = vld [vmem:[%s275 + $0xc] sm:$0xf]
        %v298 = vld [vmem:[%s278] sm:$0x1]
        %v300 = vlaneseq
        %v301 = vshrl.u32 %v300, 7
        %v302 = vsub.s32 0, %v301
        %v303 = vrot.slane %v298, %v302
        %v309 = vunpack.c.l.b16 %v294
        %v310 = vunpack.c.l.b16 %v295
        %v311 = vunpack.c.l.b16 %v296
        %v312 = vunpack.c.l.b16 %v297
        %v313 = vpack.c.b16 %v310, %v309
        %v314 = vpack.c.b16 %v312, %v311
        %vm317 = vcmask 261120
        %v319 = vsel %vm317, %v293, 0
        %321 = vmatprep.subr.bf16.mxu0 0
        %322 = vmatpush1.bf16.msra.mxu0 %v313
        %323 = vmatprep.subr.bf16.mxu0 0
        %324 = vmatpush1.bf16.msra.mxu0 %v314
        %325 = vmatprep.subr.bf16.mxu0 0
        %326 = vmatpush1.bf16.msra.mxu0 0
        %327 = vmatprep.subr.bf16.mxu0 0
        %328 = vmatpush1.bf16.msra.mxu0 0
        %329 = vmatprep.subr.bf16.mxu0 0
        %330 = vmatpush1.bf16.msra.mxu0 0
        %331 = vmatprep.subr.bf16.mxu0 0
        %332 = vmatpush1.bf16.msra.mxu0 0
        %333 = vmatprep.subr.bf16.mxu0 0
        %334 = vmatpush1.bf16.msra.mxu0 0
        %335 = vmatprep.subr.bf16.mxu0 0
        %336 = vmatpush1.bf16.msra.mxu0 0
        %337 = vmatprep.subr.bf16.mxu0 0
        %338 = vmatpush1.bf16.msra.mxu0 0
        %339 = vmatprep.subr.bf16.mxu0 0
        %340 = vmatpush1.bf16.msra.mxu0 0
        %341 = vmatprep.subr.bf16.mxu0 0
        %342 = vmatpush1.bf16.msra.mxu0 0
        %343 = vmatprep.subr.bf16.mxu0 0
        %344 = vmatpush1.bf16.msra.mxu0 0
        %345 = vmatprep.subr.bf16.mxu0 0
        %346 = vmatpush1.bf16.msra.mxu0 0
        %347 = vmatprep.subr.bf16.mxu0 0
        %348 = vmatpush1.bf16.msra.mxu0 0
        %349 = vmatprep.subr.bf16.mxu0 0
        %350 = vmatpush1.bf16.msra.mxu0 0
        %351 = vmatprep.subr.bf16.mxu0 0
        %352 = vmatpush1.bf16.msra.mxu0 0
        %353 = vmatprep.mubr.bf16.mxu0 0
        %354 = vmatmul.mubr.bf16.gmra.mrb[0].mxu0 %v319
        %v355 = vpop.f32.mrb[0].mxu0
        %v356 = vadd.f32 %v303, %v355
        %v357 = vpop.f32.mrb[0].mxu0
        %v358 = vpop.f32.mrb[0].mxu0
        %v359 = vpop.f32.mrb[0].mxu0
        %360 = vdwg.mxu0
        %v361 = vmul.f32 %v356, 0.5
        %v362 = vrcp.pop 1.4142135
        %v363 = vmul.f32 %v356, %v362
        %v364 = verf.f32.pop %v363
        %v365 = vadd.f32 %v364, 1.0
        %v366 = vmul.f32 %v361, %v365
        %v367 = vld [vmem:[#allocation2] sm:$0xff]
        %v368 = vpack.c.bf16 %v366, %v366
        %v369 = vld [vmem:[%s283] sm:$0xf]
        %v370 = vld [vmem:[%s283 + $0x4] sm:$0xf]
        %v371 = vld [vmem:[%s283 + $0x8] sm:$0xf]
        %v372 = vld [vmem:[%s283 + $0xc] sm:$0xf]
        %v373 = vld [vmem:[%s283 + $0x10] sm:$0xf]
        %v374 = vld [vmem:[%s283 + $0x14] sm:$0xf]
        %v375 = vld [vmem:[%s283 + $0x18] sm:$0xf]
        %v376 = vld [vmem:[%s283 + $0x1c] sm:$0xf]
        %v377 = vld [vmem:[%s283 + $0x20] sm:$0xf]
        %v378 = vld [vmem:[%s283 + $0x24] sm:$0xf]
        %v379 = vld [vmem:[%s283 + $0x28] sm:$0xf]
        %v380 = vld [vmem:[%s283 + $0x2c] sm:$0xf]
        %v381 = vld [vmem:[%s283 + $0x30] sm:$0xf]
        %v382 = vld [vmem:[%s283 + $0x34] sm:$0xf]
        %v383 = vld [vmem:[%s283 + $0x38] sm:$0xf]
        %v384 = vld [vmem:[%s283 + $0x3c] sm:$0xf]
        %v401 = vunpack.c.l.b16 %v369
        %v402 = vunpack.c.l.b16 %v370
        %v403 = vunpack.c.l.b16 %v371
        %v404 = vunpack.c.l.b16 %v372
        %v405 = vunpack.c.l.b16 %v373
        %v406 = vunpack.c.l.b16 %v374
        %v407 = vunpack.c.l.b16 %v375
        %v408 = vunpack.c.l.b16 %v376
        %v409 = vunpack.c.l.b16 %v377
        %v410 = vunpack.c.l.b16 %v378
        %v411 = vunpack.c.l.b16 %v379
        %v412 = vunpack.c.l.b16 %v380
        %v413 = vunpack.c.l.b16 %v381
        %v414 = vunpack.c.l.b16 %v382
        %v415 = vunpack.c.l.b16 %v383
        %v416 = vunpack.c.l.b16 %v384
        %v417 = vpack.c.b16 %v402, %v401
        %v418 = vpack.c.b16 %v404, %v403
        %v419 = vpack.c.b16 %v406, %v405
        %v420 = vpack.c.b16 %v408, %v407
        %v421 = vpack.c.b16 %v410, %v409
        %v422 = vpack.c.b16 %v412, %v411
        %v423 = vpack.c.b16 %v414, %v413
        %v424 = vpack.c.b16 %v416, %v415
        %433 = vmatprep.subr.bf16.mxu0 0
        %434 = vmatpush1.bf16.msra.mxu0 %v417
        %435 = vmatprep.subr.bf16.mxu0 0
        %436 = vmatpush1.bf16.msra.mxu0 %v418
        %437 = vmatprep.subr.bf16.mxu0 0
        %438 = vmatpush1.bf16.msra.mxu0 %v419
        %439 = vmatprep.subr.bf16.mxu0 0
        %440 = vmatpush1.bf16.msra.mxu0 %v420
        %441 = vmatprep.subr.bf16.mxu0 0
        %442 = vmatpush1.bf16.msra.mxu0 %v421
        %443 = vmatprep.subr.bf16.mxu0 0
        %444 = vmatpush1.bf16.msra.mxu0 %v422
        %445 = vmatprep.subr.bf16.mxu0 0
        %446 = vmatpush1.bf16.msra.mxu0 %v423
        %447 = vmatprep.subr.bf16.mxu0 0
        %448 = vmatpush1.bf16.msra.mxu0 %v424
        %449 = vmatprep.subr.bf16.mxu0 0
        %450 = vmatpush1.bf16.msra.mxu0 0
        %451 = vmatprep.subr.bf16.mxu0 0
        %452 = vmatpush1.bf16.msra.mxu0 0
        %453 = vmatprep.subr.bf16.mxu0 0
        %454 = vmatpush1.bf16.msra.mxu0 0
        %455 = vmatprep.subr.bf16.mxu0 0
        %456 = vmatpush1.bf16.msra.mxu0 0
        %457 = vmatprep.subr.bf16.mxu0 0
        %458 = vmatpush1.bf16.msra.mxu0 0
        %459 = vmatprep.subr.bf16.mxu0 0
        %460 = vmatpush1.bf16.msra.mxu0 0
        %461 = vmatprep.subr.bf16.mxu0 0
        %462 = vmatpush1.bf16.msra.mxu0 0
        %463 = vmatprep.subr.bf16.mxu0 0
        %464 = vmatpush1.bf16.msra.mxu0 0
        %465 = vmatprep.mubr.bf16.mxu0 0
        %466 = vmatmul.mubr.bf16.gmra.mrb[0].mxu0 %v368
        %v467 = vpop.f32.mrb[0].mxu0
        %v468 = vadd.f32 0.0, %v467
        %v469 = vpop.f32.mrb[0].mxu0
        %v470 = vpop.f32.mrb[0].mxu0
        %v471 = vpop.f32.mrb[0].mxu0
        %472 = vdwg.mxu0
        %v473 = vadd.f32 %v367, %v468
        %474 = vst.msk [vmem:[#allocation2] sm:$0xff] %vm317, %v473
        // Predicated region
        $region45: #{feed_forward_pallas.1} parent=39 // pred_check
          %p475 = pneg %p286
        $region46: #{feed_forward_pallas.1} parent=39 // pred_check_branch
          %477 = sbr.rel (%p475) target = $region48
        $region47: #{feed_forward_pallas.1} parent=39 // pred_region
          %v478 = vld [vmem:[#allocation2] sm:$0xff]
          %v479 = vld [vmem:[%s4] sm:$0x1]
          %v481 = vlaneseq
          %v482 = vshrl.u32 %v481, 7
          %v483 = vsub.s32 0, %v482
          %v484 = vrot.slane %v479, %v483
          %v486 = vadd.f32 %v478, %v484
          %487 = vst.msk [vmem:[%s267] sm:$0xff] %vm317, %v486
        $region48: #{feed_forward_pallas.1} parent=39 // pred_fallthru
          _
        %s488 = sand.u32 %s164, 1
        %s489 = scalar_lea.sflag [#allocation4], %s488
        %s490 = sand.u32 %s164, 1
        %s491 = smul.addr %s490, 8
        %s492 = scalar_lea.vmem [#allocation3], %s491
        // Predicated region
        $region49: #{feed_forward_pallas.1} parent=39 // pred_check
          %p493 = pneg %p174
        $region50: #{feed_forward_pallas.1} parent=39 // pred_check_branch
          %495 = sbr.rel (%p493) target = $region52
        $region51: #{feed_forward_pallas.1} parent=39 // pred_region
          %s497 = ssub.s32 128, 128
          %498 = vsyncadd %s489, %s497
          %s499 = smul.addr %s23, 128
          %s500 = scalar_lea.hbm %s5, %s499
          %s502 = sshll.u32 %s492, 4
          %s503 = int_to_ptr.vmem [resolvable:$true] %s502
          %505 = dma.vmem_to_hbm [thread:$0]  %s503, 128, %s500, %s489
        $region52: #{feed_forward_pallas.1} parent=39 // pred_fallthru
          _
      $region40: #{feed_forward_pallas.1} parent=5 // pred_fallthru
        _
      %p506 = scmp.le.s32.totalorder 2, %s14
      // Predicated region
      $region53: #{feed_forward_pallas.1} parent=5 // pred_check
        %p507 = pneg %p506
      $region54: #{feed_forward_pallas.1} parent=5 // pred_check_branch
        %509 = sbr.rel (%p507) target = $region56
      $region55: #{feed_forward_pallas.1} parent=5 // pred_region
        %s510 = ssub.s32 %s14, 2
        // Predicated region
        $region57: #{feed_forward_pallas.1} parent=55 // pred_check
          %p511 = pneg %p180
        $region58: #{feed_forward_pallas.1} parent=55 // pred_check_branch
          %513 = sbr.rel (%p511) target = $region60
        $region59: #{feed_forward_pallas.1} parent=55 // pred_region
          %s514 = sand.u32 %s165, 1
          %s515 = scalar_lea.sflag [#allocation4], %s514
          %s516 = sand.u32 %s165, 1
          %s517 = smul.addr %s516, 8
          %s518 = scalar_lea.vmem [#allocation3], %s517
          %519 = dma.done %s515, 128
        $region60: #{feed_forward_pallas.1} parent=55 // pred_fallthru
          _
      $region56: #{feed_forward_pallas.1} parent=5 // pred_fallthru
        _
    $region6: #{feed_forward_pallas.1} parent=1 // loop_footer
      %s18 = sadd.s32 1, %s14
    $region7: #{feed_forward_pallas.1} parent=1 // loop_footer_branch
      %13 = sbr.rel target = $region3
    $region8: #{feed_forward_pallas.1} parent=1 // loop_exit
      _
    %520 = vsyncpa [#allocation4], 1
    %s521 = scalar_lea.sflag [#allocation4], 1
    %522 = vsyncpa %s521, 1

// kernel: feed_forward_pallas.1
$region0: #{feed_forward_pallas.1}
  #allocation0 [shape = 'u32[]', space=smem, size = 0x4, offset = 0x4, fixed_abs, tag = 'smem constant byte address 0x4 - core index']
  #allocation1 [shape = 'u32[144,128]{1,0:T(1,128)}', space=vmem, size = 0x12000, scoped, tag = 'internal scratch']
  #allocation2 [shape = 'f32[8,32]{1,0:T(8,128)}', space=vmem, size = 0x1000, scoped, tag = 'scratch operand']
  %s0 = inlined_call_operand.vmem [shape: f32[16,32], index: 0, kind: input, shape index: {}]
  %s1 = inlined_call_operand.vmem [shape: bf16[32,128], index: 1, kind: input, shape index: {}]
  %s2 = inlined_call_operand.vmem [shape: f32[1,128], index: 2, kind: input, shape index: {}]
  %s3 = inlined_call_operand.vmem [shape: bf16[128,32], index: 3, kind: input, shape index: {}]
  %s4 = inlined_call_operand.vmem [shape: f32[1,32], index: 4, kind: input, shape index: {}]
  %s5 = inlined_call_operand.hbm [shape: f32[16,32], index: 5, kind: output, shape index: {}]
  %s6 = sld [smem:[#allocation0]]
  $region61: #{feed_forward_pallas.1} parent=0
    _
  %s8 = ssub.s32 1, %s6
  %s9 = scalar_select 0, %s8, %s6
  $region1: #{feed_forward_pallas.1} parent=0
    #allocation3 [shape = 'u8[8192]{0}', space=vmem, size = 0x2000, scoped, tag = 'output window, operand 0']
    #allocation4 [shape = 's32[2]{0}', space=sflag, size = 0x8, scoped, tag = 'scoped memory for feed_forward_pallas.1']
    %10 = vsyncpa [#allocation4], 0
    %s11 = scalar_lea.sflag [#allocation4], 1
    %12 = vsyncpa %s11, 0
    loop: start=0, step=1, limit=4
    $region2: #{feed_forward_pallas.1} parent=1 // loop_pre_header
      _
    $region3: #{feed_forward_pallas.1} parent=1 // loop_header
      %s14 = sphi 0, %s18
      %p15 = scmp.ge.s32.totalorder %s14, 4
      %s21 = sphi 0, %s33
      %s22 = sphi 0, %s29
      %s23 = sphi 0, %s21
      %s24 = sphi 0, %s22
      %s25 = sphi 0, %s23
      %s26 = sphi 0, %s24
      %s36 = sphi 0, %s38
      %s39 = sphi 0, %s36
      %s40 = sphi 0, %s39
      %s56 = sphi 0, %s40
      %s62 = sphi 0, %s64
      %s65 = sphi 0, %s62
      %s66 = sphi 0, %s65
      %s82 = sphi 0, %s66
      %s88 = sphi 0, %s90
      %s91 = sphi 0, %s88
      %s92 = sphi 0, %s91
      %s108 = sphi 0, %s92
      %s114 = sphi 0, %s116
      %s117 = sphi 0, %s114
      %s118 = sphi 0, %s117
      %s134 = sphi 0, %s118
      %s138 = sphi 0, %s138
      %s140 = sphi 0, %s138
      %s141 = sphi 0, %s140
      %s155 = sphi 0, %s141
      %s161 = sphi 0, %s163
      %s164 = sphi 0, %s161
      %s165 = sphi 0, %s164
      %s181 = sphi 0, %s165
    $region4: #{feed_forward_pallas.1} parent=1 // loop_header_branch
      %17 = sbr.rel (%p15) target = $region8
    $region5: #{feed_forward_pallas.1} parent=1 // loop_body
      %s19 = ssub.s32 %s14, 1
      %s20 = ssub.s32 %s14, 2
      %s27 = sadd.s32 1, %s22
      %p28 = scmp.ge.s32.totalorder %s27, 1
      %s29 = scalar_select %p28, 0, %s27
      %s30 = sadd.s32 1, %s21
      %s31 = scalar_select %p28, %s30, %s21
      %p32 = scmp.ge.s32.totalorder %s31, 2
      %s33 = scalar_select %p32, 0, %s31
      %s34 = ssub.s32 %s21, %s33
      %p35 = scmp.eq.s32.totalorder %s34, 0
      %s37 = sadd.s32 %s36, 1
      %s38 = scalar_select %p35, %s36, %s37
      %p41 = pneg %p35
      %p42 = scmp.eq.s32.totalorder %s14, 1
      %p43 = por %p41, %p42
      %p44 = scmp.ne.s32.totalorder %s36, %s39
      %p45 = scmp.eq.s32.totalorder %s14, 0
      %p46 = por %p44, %p45
      %p47 = scmp.ne.s32.totalorder %s36, %s39
      %p48 = scmp.eq.s32.totalorder %s19, 1
      %p49 = por %p47, %p48
      %p50 = scmp.ne.s32.totalorder %s39, %s40
      %p51 = scmp.eq.s32.totalorder %s19, 0
      %p52 = por %p50, %p51
      %p53 = scmp.ne.s32.totalorder %s39, %s40
      %p54 = scmp.eq.s32.totalorder %s20, 1
      %p55 = por %p53, %p54
      %p57 = scmp.ne.s32.totalorder %s40, %s56
      %p58 = scmp.eq.s32.totalorder %s20, 0
      %p59 = por %p57, %p58
      %s60 = ssub.s32 %s22, %s29
      %p61 = scmp.eq.s32.totalorder %s60, 0
      %s63 = sadd.s32 %s62, 1
      %s64 = scalar_select %p61, %s62, %s63
      %p67 = pneg %p61
      %p68 = scmp.eq.s32.totalorder %s14, 1
      %p69 = por %p67, %p68
      %p70 = scmp.ne.s32.totalorder %s62, %s65
      %p71 = scmp.eq.s32.totalorder %s14, 0
      %p72 = por %p70, %p71
      %p73 = scmp.ne.s32.totalorder %s62, %s65
      %p74 = scmp.eq.s32.totalorder %s19, 1
      %p75 = por %p73, %p74
      %p76 = scmp.ne.s32.totalorder %s65, %s66
      %p77 = scmp.eq.s32.totalorder %s19, 0
      %p78 = por %p76, %p77
      %p79 = scmp.ne.s32.totalorder %s65, %s66
      %p80 = scmp.eq.s32.totalorder %s20, 1
      %p81 = por %p79, %p80
      %p83 = scmp.ne.s32.totalorder %s66, %s82
      %p84 = scmp.eq.s32.totalorder %s20, 0
      %p85 = por %p83, %p84
      %s86 = ssub.s32 %s22, %s29
      %p87 = scmp.eq.s32.totalorder %s86, 0
      %s89 = sadd.s32 %s88, 1
      %s90 = scalar_select %p87, %s88, %s89
      %p93 = pneg %p87
      %p94 = scmp.eq.s32.totalorder %s14, 1
      %p95 = por %p93, %p94
      %p96 = scmp.ne.s32.totalorder %s88, %s91
      %p97 = scmp.eq.s32.totalorder %s14, 0
      %p98 = por %p96, %p97
      %p99 = scmp.ne.s32.totalorder %s88, %s91
      %p100 = scmp.eq.s32.totalorder %s19, 1
      %p101 = por %p99, %p100
      %p102 = scmp.ne.s32.totalorder %s91, %s92
      %p103 = scmp.eq.s32.totalorder %s19, 0
      %p104 = por %p102, %p103
      %p105 = scmp.ne.s32.totalorder %s91, %s92
      %p106 = scmp.eq.s32.totalorder %s20, 1
      %p107 = por %p105, %p106
      %p109 = scmp.ne.s32.totalorder %s92, %s108
      %p110 = scmp.eq.s32.totalorder %s20, 0
      %p111 = por %p109, %p110
      %s112 = ssub.s32 %s22, %s29
      %p113 = scmp.eq.s32.totalorder %s112, 0
      %s115 = sadd.s32 %s114, 1
      %s116 = scalar_select %p113, %s114, %s115
      %p119 = pneg %p113
      %p120 = scmp.eq.s32.totalorder %s14, 1
      %p121 = por %p119, %p120
      %p122 = scmp.ne.s32.totalorder %s114, %s117
      %p123 = scmp.eq.s32.totalorder %s14, 0
      %p124 = por %p122, %p123
      %p125 = scmp.ne.s32.totalorder %s114, %s117
      %p126 = scmp.eq.s32.totalorder %s19, 1
      %p127 = por %p125, %p126
      %p128 = scmp.ne.s32.totalorder %s117, %s118
      %p129 = scmp.eq.s32.totalorder %s19, 0
      %p130 = por %p128, %p129
      %p131 = scmp.ne.s32.totalorder %s117, %s118
      %p132 = scmp.eq.s32.totalorder %s20, 1
      %p133 = por %p131, %p132
      %p135 = scmp.ne.s32.totalorder %s118, %s134
      %p136 = scmp.eq.s32.totalorder %s20, 0
      %p137 = por %p135, %p136
      %s139 = sadd.s32 %s138, 1
      %p142 = scmp.eq.s32.totalorder %s14, 1
      %p143 = scmp.ne.s32.totalorder %s138, %s140
      %p144 = scmp.eq.s32.totalorder %s14, 0
      %p145 = por %p143, %p144
      %p146 = scmp.ne.s32.totalorder %s138, %s140
      %p147 = scmp.eq.s32.totalorder %s19, 1
      %p148 = por %p146, %p147
      %p149 = scmp.ne.s32.totalorder %s140, %s141
      %p150 = scmp.eq.s32.totalorder %s19, 0
      %p151 = por %p149, %p150
      %p152 = scmp.ne.s32.totalorder %s140, %s141
      %p153 = scmp.eq.s32.totalorder %s20, 1
      %p154 = por %p152, %p153
      %p156 = scmp.ne.s32.totalorder %s141, %s155
      %p157 = scmp.eq.s32.totalorder %s20, 0
      %p158 = por %p156, %p157
      %s159 = ssub.s32 %s21, %s33
      %p160 = scmp.eq.s32.totalorder %s159, 0
      %s162 = sadd.s32 %s161, 1
      %s163 = scalar_select %p160, %s161, %s162
      %p166 = pneg %p160
      %p167 = scmp.eq.s32.totalorder %s14, 1
      %p168 = por %p166, %p167
      %p169 = scmp.ne.s32.totalorder %s161, %s164
      %p170 = scmp.eq.s32.totalorder %s14, 0
      %p171 = por %p169, %p170
      %p172 = scmp.ne.s32.totalorder %s161, %s164
      %p173 = scmp.eq.s32.totalorder %s19, 1
      %p174 = por %p172, %p173
      %p175 = scmp.ne.s32.totalorder %s164, %s165
      %p176 = scmp.eq.s32.totalorder %s19, 0
      %p177 = por %p175, %p176
      %p178 = scmp.ne.s32.totalorder %s164, %s165
      %p179 = scmp.eq.s32.totalorder %s20, 1
      %p180 = por %p178, %p179
      %p182 = scmp.ne.s32.totalorder %s165, %s181
      %p183 = scmp.eq.s32.totalorder %s20, 0
      %p184 = por %p182, %p183
      %p185 = scmp.le.s32.totalorder 1, %s14
      %p186 = scmp.lt.s32.totalorder %s14, 3
      %p187 = pnand %p185, %p186
      %p188 = pneg %p187
      // Predicated region
      $region9: #{feed_forward_pallas.1} parent=5 // pred_check
        _
      $region10: #{feed_forward_pallas.1} parent=5 // pred_check_branch
        %190 = sbr.rel (%p187) target = $region12
      $region11: #{feed_forward_pallas.1} parent=5 // pred_region
        %s191 = ssub.s32 %s14, 1
        // Predicated region
        $region13: #{feed_forward_pallas.1} parent=11 // pred_check
          %p192 = pneg %p78
        $region14: #{feed_forward_pallas.1} parent=11 // pred_check_branch
          %194 = sbr.rel (%p192) target = $region16
        $region15: #{feed_forward_pallas.1} parent=11 // pred_region
          %p195 = scmp.lt.s32.totalorder %s24, 0
          %s196 = scalar_select %p195, %s24, 0
          %s197 = smul.addr %s196, 4
          %s198 = scalar_lea.vmem %s1, %s197
        $region16: #{feed_forward_pallas.1} parent=11 // pred_fallthru
          _
        // Predicated region
        $region17: #{feed_forward_pallas.1} parent=11 // pred_check
          %p199 = pneg %p104
        $region18: #{feed_forward_pallas.1} parent=11 // pred_check_branch
          %201 = sbr.rel (%p199) target = $region20
        $region19: #{feed_forward_pallas.1} parent=11 // pred_region
          %p202 = scmp.lt.s32.totalorder %s24, 0
          %s203 = scalar_select %p202, %s24, 0
          %s204 = scalar_lea.vmem %s2, %s203
        $region20: #{feed_forward_pallas.1} parent=11 // pred_fallthru
          _
        // Predicated region
        $region21: #{feed_forward_pallas.1} parent=11 // pred_check
          %p205 = pneg %p130
        $region22: #{feed_forward_pallas.1} parent=11 // pred_check_branch
          %207 = sbr.rel (%p205) target = $region24
        $region23: #{feed_forward_pallas.1} parent=11 // pred_region
          %s208 = smul.u32 16, %s24
          %p209 = scmp.lt.s32.totalorder %s208, 15
          %s210 = scalar_select %p209, %s208, 15
          %s211 = smul.addr %s210, 4
          %s212 = scalar_lea.vmem %s3, %s211
          %s213 = smul.u32 16, %s24
        $region24: #{feed_forward_pallas.1} parent=11 // pred_fallthru
          _
        // Predicated region
        $region25: #{feed_forward_pallas.1} parent=11 // pred_check
          %p214 = pneg %p151
        $region26: #{feed_forward_pallas.1} parent=11 // pred_check_branch
          %216 = sbr.rel (%p214) target = $region28
        $region27: #{feed_forward_pallas.1} parent=11 // pred_region
          _
        $region28: #{feed_forward_pallas.1} parent=11 // pred_fallthru
          _
      $region12: #{feed_forward_pallas.1} parent=5 // pred_fallthru
        _
      %p217 = scmp.lt.s32.totalorder %s14, 2
      // Predicated region
      $region29: #{feed_forward_pallas.1} parent=5 // pred_check
        %p218 = pneg %p217
      $region30: #{feed_forward_pallas.1} parent=5 // pred_check_branch
        %220 = sbr.rel (%p218) target = $region32
      $region31: #{feed_forward_pallas.1} parent=5 // pred_region
        // Predicated region
        $region33: #{feed_forward_pallas.1} parent=31 // pred_check
          %p221 = pneg %p46
        $region34: #{feed_forward_pallas.1} parent=31 // pred_check_branch
          %223 = sbr.rel (%p221) target = $region36
        $region35: #{feed_forward_pallas.1} parent=31 // pred_region
          %p224 = scmp.lt.s32.totalorder %s21, 1
          %s225 = scalar_select %p224, %s21, 1
          %s226 = smul.addr %s225, 8
          %s227 = scalar_lea.vmem %s0, %s226
        $region36: #{feed_forward_pallas.1} parent=31 // pred_fallthru
          _
      $region32: #{feed_forward_pallas.1} parent=5 // pred_fallthru
        _
      %p228 = scmp.le.s32.totalorder 1, %s14
      %p229 = scmp.lt.s32.totalorder %s14, 3
      %p230 = pnand %p228, %p229
      %p231 = pneg %p230
      // Predicated region
      $region37: #{feed_forward_pallas.1} parent=5 // pred_check
        _
      $region38: #{feed_forward_pallas.1} parent=5 // pred_check_branch
        %233 = sbr.rel (%p230) target = $region40
      $region39: #{feed_forward_pallas.1} parent=5 // pred_region
        %s234 = ssub.s32 %s14, 1
        %p235 = scmp.lt.s32.totalorder %s23, 1
        %s236 = scalar_select %p235, %s23, 1
        %s237 = smul.addr %s236, 8
        %s238 = scalar_lea.vmem %s0, %s237
        %p239 = pneg %p52
        %p240 = pneg %p49
        %p241 = scmp.lt.s32.totalorder %s24, 0
        %s242 = scalar_select %p241, %s24, 0
        %s243 = smul.addr %s242, 4
        %s244 = scalar_lea.vmem %s1, %s243
        %p245 = pneg %p78
        %p246 = pneg %p75
        %p247 = scmp.lt.s32.totalorder %s24, 0
        %s248 = scalar_select %p247, %s24, 0
        %s249 = scalar_lea.vmem %s2, %s248
        %p250 = pneg %p104
        %p251 = pneg %p101
        %s252 = smul.u32 16, %s24
        %p253 = scmp.lt.s32.totalorder %s252, 15
        %s254 = scalar_select %p253, %s252, 15
        %s255 = smul.addr %s254, 4
        %s256 = scalar_lea.vmem %s3, %s255
        %p257 = pneg %p130
        %p258 = pneg %p127
        %p259 = pneg %p151
        %p260 = pneg %p148
        %p261 = pneg %p177
        %p262 = pneg %p174
        %s263 = sand.u32 %s164, 1
        %s264 = scalar_lea.sflag [#allocation4], %s263
        %s265 = sand.u32 %s164, 1
        %s266 = smul.addr %s265, 8
        %s267 = scalar_lea.vmem [#allocation3], %s266
        %p268 = scmp.lt.s32.totalorder %s23, 1
        %s269 = scalar_select %p268, %s23, 1
        %s270 = smul.addr %s269, 8
        %s271 = scalar_lea.vmem %s0, %s270
        %p272 = scmp.lt.s32.totalorder %s24, 0
        %s273 = scalar_select %p272, %s24, 0
        %s274 = smul.addr %s273, 4
        %s275 = scalar_lea.vmem %s1, %s274
        %p276 = scmp.lt.s32.totalorder %s24, 0
        %s277 = scalar_select %p276, %s24, 0
        %s278 = scalar_lea.vmem %s2, %s277
        %s279 = smul.u32 16, %s24
        %p280 = scmp.lt.s32.totalorder %s279, 15
        %s281 = scalar_select %p280, %s279, 15
        %s282 = smul.addr %s281, 4
        %s283 = scalar_lea.vmem %s3, %s282
        %s284 = smul.u32 16, %s24
        %p286 = scmp.eq.s32.totalorder %s24, 0
        // Predicated region
        $region41: #{feed_forward_pallas.1} parent=39 // pred_check
          %p287 = pneg %p286
        $region42: #{feed_forward_pallas.1} parent=39 // pred_check_branch
          %289 = sbr.rel (%p287) target = $region44
        $region43: #{feed_forward_pallas.1} parent=39 // pred_region
          %vm290 = vcmask 261120
          %291 = vst.msk [vmem:[#allocation2] sm:$0xff] %vm290, 0.0
        $region44: #{feed_forward_pallas.1} parent=39 // pred_fallthru
          _
        %v292 = vld [vmem:[%s271] sm:$0xff]
        %v293 = vpack.c.bf16 %v292, %v292
        %v294 = vld [vmem:[%s275] sm:$0xf]
        %v295 = vld [vmem:[%s275 + $0x4] sm:$0xf]
        %v296 = vld [vmem:[%s275 + $0x8] sm:$0xf]
        %v297 = vld [vmem:[%s275 + $0xc] sm:$0xf]
        %v298 = vld [vmem:[%s278] sm:$0x1]
        %v300 = vlaneseq
        %v301 = vshrl.u32 %v300, 7
        %v302 = vsub.s32 0, %v301
        %v303 = vrot.slane %v298, %v302
        %v309 = vunpack.c.l.b16 %v294
        %v310 = vunpack.c.l.b16 %v295
        %v311 = vunpack.c.l.b16 %v296
        %v312 = vunpack.c.l.b16 %v297
        %v313 = vpack.c.b16 %v310, %v309
        %v314 = vpack.c.b16 %v312, %v311
        %vm317 = vcmask 261120
        %v319 = vsel %vm317, %v293, 0
        %321 = vmatprep.subr.bf16.mxu0 0
        %322 = vmatpush1.bf16.msra.mxu0 %v313
        %323 = vmatprep.subr.bf16.mxu0 0
        %324 = vmatpush1.bf16.msra.mxu0 %v314
        %325 = vmatprep.subr.bf16.mxu0 0
        %326 = vmatpush1.bf16.msra.mxu0 0
        %327 = vmatprep.subr.bf16.mxu0 0
        %328 = vmatpush1.bf16.msra.mxu0 0
        %329 = vmatprep.subr.bf16.mxu0 0
        %330 = vmatpush1.bf16.msra.mxu0 0
        %331 = vmatprep.subr.bf16.mxu0 0
        %332 = vmatpush1.bf16.msra.mxu0 0
        %333 = vmatprep.subr.bf16.mxu0 0
        %334 = vmatpush1.bf16.msra.mxu0 0
        %335 = vmatprep.subr.bf16.mxu0 0
        %336 = vmatpush1.bf16.msra.mxu0 0
        %337 = vmatprep.subr.bf16.mxu0 0
        %338 = vmatpush1.bf16.msra.mxu0 0
        %339 = vmatprep.subr.bf16.mxu0 0
        %340 = vmatpush1.bf16.msra.mxu0 0
        %341 = vmatprep.subr.bf16.mxu0 0
        %342 = vmatpush1.bf16.msra.mxu0 0
        %343 = vmatprep.subr.bf16.mxu0 0
        %344 = vmatpush1.bf16.msra.mxu0 0
        %345 = vmatprep.subr.bf16.mxu0 0
        %346 = vmatpush1.bf16.msra.mxu0 0
        %347 = vmatprep.subr.bf16.mxu0 0
        %348 = vmatpush1.bf16.msra.mxu0 0
        %349 = vmatprep.subr.bf16.mxu0 0
        %350 = vmatpush1.bf16.msra.mxu0 0
        %351 = vmatprep.subr.bf16.mxu0 0
        %352 = vmatpush1.bf16.msra.mxu0 0
        %353 = vmatprep.mubr.bf16.mxu0 0
        %354 = vmatmul.mubr.bf16.gmra.mrb[0].mxu0 %v319
        %v355 = vpop.f32.mrb[0].mxu0
        %v356 = vadd.f32 %v303, %v355
        %v357 = vpop.f32.mrb[0].mxu0
        %v358 = vpop.f32.mrb[0].mxu0
        %v359 = vpop.f32.mrb[0].mxu0
        %360 = vdwg.mxu0
        %v361 = vmul.f32 %v356, 0.5
        %v362 = vrcp.pop 1.4142135
        %v363 = vmul.f32 %v356, %v362
        %v364 = verf.f32.pop %v363
        %v365 = vadd.f32 %v364, 1.0
        %v366 = vmul.f32 %v361, %v365
        %v367 = vld [vmem:[#allocation2] sm:$0xff]
        %v368 = vpack.c.bf16 %v366, %v366
        %v369 = vld [vmem:[%s283] sm:$0xf]
        %v370 = vld [vmem:[%s283 + $0x4] sm:$0xf]
        %v371 = vld [vmem:[%s283 + $0x8] sm:$0xf]
        %v372 = vld [vmem:[%s283 + $0xc] sm:$0xf]
        %v373 = vld [vmem:[%s283 + $0x10] sm:$0xf]
        %v374 = vld [vmem:[%s283 + $0x14] sm:$0xf]
        %v375 = vld [vmem:[%s283 + $0x18] sm:$0xf]
        %v376 = vld [vmem:[%s283 + $0x1c] sm:$0xf]
        %v377 = vld [vmem:[%s283 + $0x20] sm:$0xf]
        %v378 = vld [vmem:[%s283 + $0x24] sm:$0xf]
        %v379 = vld [vmem:[%s283 + $0x28] sm:$0xf]
        %v380 = vld [vmem:[%s283 + $0x2c] sm:$0xf]
        %v381 = vld [vmem:[%s283 + $0x30] sm:$0xf]
        %v382 = vld [vmem:[%s283 + $0x34] sm:$0xf]
        %v383 = vld [vmem:[%s283 + $0x38] sm:$0xf]
        %v384 = vld [vmem:[%s283 + $0x3c] sm:$0xf]
        %v401 = vunpack.c.l.b16 %v369
        %v402 = vunpack.c.l.b16 %v370
        %v403 = vunpack.c.l.b16 %v371
        %v404 = vunpack.c.l.b16 %v372
        %v405 = vunpack.c.l.b16 %v373
        %v406 = vunpack.c.l.b16 %v374
        %v407 = vunpack.c.l.b16 %v375
        %v408 = vunpack.c.l.b16 %v376
        %v409 = vunpack.c.l.b16 %v377
        %v410 = vunpack.c.l.b16 %v378
        %v411 = vunpack.c.l.b16 %v379
        %v412 = vunpack.c.l.b16 %v380
        %v413 = vunpack.c.l.b16 %v381
        %v414 = vunpack.c.l.b16 %v382
        %v415 = vunpack.c.l.b16 %v383
        %v416 = vunpack.c.l.b16 %v384
        %v417 = vpack.c.b16 %v402, %v401
        %v418 = vpack.c.b16 %v404, %v403
        %v419 = vpack.c.b16 %v406, %v405
        %v420 = vpack.c.b16 %v408, %v407
        %v421 = vpack.c.b16 %v410, %v409
        %v422 = vpack.c.b16 %v412, %v411
        %v423 = vpack.c.b16 %v414, %v413
        %v424 = vpack.c.b16 %v416, %v415
        %433 = vmatprep.subr.bf16.mxu0 0
        %434 = vmatpush1.bf16.msra.mxu0 %v417
        %435 = vmatprep.subr.bf16.mxu0 0
        %436 = vmatpush1.bf16.msra.mxu0 %v418
        %437 = vmatprep.subr.bf16.mxu0 0
        %438 = vmatpush1.bf16.msra.mxu0 %v419
        %439 = vmatprep.subr.bf16.mxu0 0
        %440 = vmatpush1.bf16.msra.mxu0 %v420
        %441 = vmatprep.subr.bf16.mxu0 0
        %442 = vmatpush1.bf16.msra.mxu0 %v421
        %443 = vmatprep.subr.bf16.mxu0 0
        %444 = vmatpush1.bf16.msra.mxu0 %v422
        %445 = vmatprep.subr.bf16.mxu0 0
        %446 = vmatpush1.bf16.msra.mxu0 %v423
        %447 = vmatprep.subr.bf16.mxu0 0
        %448 = vmatpush1.bf16.msra.mxu0 %v424
        %449 = vmatprep.subr.bf16.mxu0 0
        %450 = vmatpush1.bf16.msra.mxu0 0
        %451 = vmatprep.subr.bf16.mxu0 0
        %452 = vmatpush1.bf16.msra.mxu0 0
        %453 = vmatprep.subr.bf16.mxu0 0
        %454 = vmatpush1.bf16.msra.mxu0 0
        %455 = vmatprep.subr.bf16.mxu0 0
        %456 = vmatpush1.bf16.msra.mxu0 0
        %457 = vmatprep.subr.bf16.mxu0 0
        %458 = vmatpush1.bf16.msra.mxu0 0
        %459 = vmatprep.subr.bf16.mxu0 0
        %460 = vmatpush1.bf16.msra.mxu0 0
        %461 = vmatprep.subr.bf16.mxu0 0
        %462 = vmatpush1.bf16.msra.mxu0 0
        %463 = vmatprep.subr.bf16.mxu0 0
        %464 = vmatpush1.bf16.msra.mxu0 0
        %465 = vmatprep.mubr.bf16.mxu0 0
        %466 = vmatmul.mubr.bf16.gmra.mrb[0].mxu0 %v368
        %v467 = vpop.f32.mrb[0].mxu0
        %v468 = vadd.f32 0.0, %v467
        %v469 = vpop.f32.mrb[0].mxu0
        %v470 = vpop.f32.mrb[0].mxu0
        %v471 = vpop.f32.mrb[0].mxu0
        %472 = vdwg.mxu0
        %v473 = vadd.f32 %v367, %v468
        %474 = vst.msk [vmem:[#allocation2] sm:$0xff] %vm317, %v473
        // Predicated region
        $region45: #{feed_forward_pallas.1} parent=39 // pred_check
          %p475 = pneg %p286
        $region46: #{feed_forward_pallas.1} parent=39 // pred_check_branch
          %477 = sbr.rel (%p475) target = $region48
        $region47: #{feed_forward_pallas.1} parent=39 // pred_region
          %v478 = vld [vmem:[#allocation2] sm:$0xff]
          %v479 = vld [vmem:[%s4] sm:$0x1]
          %v481 = vlaneseq
          %v482 = vshrl.u32 %v481, 7
          %v483 = vsub.s32 0, %v482
          %v484 = vrot.slane %v479, %v483
          %v486 = vadd.f32 %v478, %v484
          %487 = vst.msk [vmem:[%s267] sm:$0xff] %vm317, %v486
        $region48: #{feed_forward_pallas.1} parent=39 // pred_fallthru
          _
        %s488 = sand.u32 %s164, 1
        %s489 = scalar_lea.sflag [#allocation4], %s488
        %s490 = sand.u32 %s164, 1
        %s491 = smul.addr %s490, 8
        %s492 = scalar_lea.vmem [#allocation3], %s491
        // Predicated region
        $region49: #{feed_forward_pallas.1} parent=39 // pred_check
          %p493 = pneg %p174
        $region50: #{feed_forward_pallas.1} parent=39 // pred_check_branch
          %495 = sbr.rel (%p493) target = $region52
        $region51: #{feed_forward_pallas.1} parent=39 // pred_region
          %s497 = ssub.s32 128, 128
          %498 = vsyncadd %s489, %s497
          %s499 = smul.addr %s23, 128
          %s500 = scalar_lea.hbm %s5, %s499
          %s502 = sshll.u32 %s492, 4
          %s503 = int_to_ptr.vmem [resolvable:$true] %s502
          %505 = dma.vmem_to_hbm [thread:$0]  %s503, 128, %s500, %s489
        $region52: #{feed_forward_pallas.1} parent=39 // pred_fallthru
          _
      $region40: #{feed_forward_pallas.1} parent=5 // pred_fallthru
        _
      %p506 = scmp.le.s32.totalorder 2, %s14
      // Predicated region
      $region53: #{feed_forward_pallas.1} parent=5 // pred_check
        %p507 = pneg %p506
      $region54: #{feed_forward_pallas.1} parent=5 // pred_check_branch
        %509 = sbr.rel (%p507) target = $region56
      $region55: #{feed_forward_pallas.1} parent=5 // pred_region
        %s510 = ssub.s32 %s14, 2
        // Predicated region
        $region57: #{feed_forward_pallas.1} parent=55 // pred_check
          %p511 = pneg %p180
        $region58: #{feed_forward_pallas.1} parent=55 // pred_check_branch
          %513 = sbr.rel (%p511) target = $region60
        $region59: #{feed_forward_pallas.1} parent=55 // pred_region
          %s514 = sand.u32 %s165, 1
          %s515 = scalar_lea.sflag [#allocation4], %s514
          %s516 = sand.u32 %s165, 1
          %s517 = smul.addr %s516, 8
          %s518 = scalar_lea.vmem [#allocation3], %s517
          %519 = dma.done %s515, 128
        $region60: #{feed_forward_pallas.1} parent=55 // pred_fallthru
          _
      $region56: #{feed_forward_pallas.1} parent=5 // pred_fallthru
        _
    $region6: #{feed_forward_pallas.1} parent=1 // loop_footer
      %s18 = sadd.s32 1, %s14
    $region7: #{feed_forward_pallas.1} parent=1 // loop_footer_branch
      %13 = sbr.rel target = $region3
    $region8: #{feed_forward_pallas.1} parent=1 // loop_exit
      _
    %520 = vsyncpa [#allocation4], 1
    %s521 = scalar_lea.sflag [#allocation4], 1
    %522 = vsyncpa %s521, 1

</llo_original>
